<compile_context>
chip_gen: v5e
topology: v5e:2x2
jax: 0.10.0
libtpu: 0.0.40
codegen_flags: <defaults>
</compile_context>

<pallas_src>
import math

import jax
import jax.numpy as jnp
from jax.experimental import pallas as pl
from jax.experimental.pallas import tpu as pltpu


def _drop_path_kernel(scale_ref, x_ref, o_ref):
    # scale_ref: (tB, 1) f32 per-sample scale (0.0 or 1/keep_prob)
    # x_ref/o_ref: (tB, tN) tile of the flattened per-sample slab
    x = x_ref[...]
    s = scale_ref[...].astype(x.dtype)       # broadcast (tB,1) over the row
    o_ref[...] = (x * s).astype(o_ref.dtype)


def _choose_tiles(B, N, itemsize, target_bytes=2 * 1024 * 1024):
    """Pick (tB, tN) so one block is lane-dense and <= ~target_bytes."""
    # Rows per block: full batch if tiny, else a sublane-aligned chunk of 8.
    tB = B if B <= 8 else 8
    if N > 0 and N % 128 == 0:
        # Largest multiple of 128 that divides N and keeps the block within budget.
        n128 = N // 128
        best = 1
        for c in range(1, n128 + 1):
            if n128 % c == 0 and c * 128 * tB * itemsize <= target_bytes:
                best = c
        tN = best * 128
    else:
        # Non-128-aligned feature size: the block must span the full last dim.
        tN = max(N, 1)
    return tB, tN


def drop_path(x, drop_prob, *, key=None, seed=0, training=True):
    """Pallas DropPath. Masks whole samples along axis 0 of `x`."""
    if (not training) or (drop_prob is None) or (drop_prob == 0.0):
        return x
    keep_prob = 1.0 - float(drop_prob)

    B = x.shape[0]
    N = int(math.prod(x.shape[1:])) if x.ndim > 1 else 1
    x2 = x.reshape(B, N)

    # Per-sample Bernoulli in the wrapper (reproducible, no in-kernel PRNG).
    if key is None:
        key = jax.random.PRNGKey(seed)
    keep = jax.random.bernoulli(key, p=keep_prob, shape=(B,))
    scale = jnp.where(keep,
                      jnp.float32(1.0 / keep_prob),
                      jnp.float32(0.0)).reshape(B, 1)

    tB, tN = _choose_tiles(B, N, jnp.dtype(x.dtype).itemsize)
    grid = (pl.cdiv(B, tB), pl.cdiv(N, tN))

    out2 = pl.pallas_call(
        _drop_path_kernel,
        out_shape=jax.ShapeDtypeStruct((B, N), x.dtype),
        grid=grid,
        in_specs=[
            pl.BlockSpec((tB, 1), lambda i, j: (i, 0)),    # per-sample scale
            pl.BlockSpec((tB, tN), lambda i, j: (i, j)),   # activation tile
        ],
        out_specs=pl.BlockSpec((tB, tN), lambda i, j: (i, j)),
        compiler_params=pltpu.CompilerParams(
            dimension_semantics=("parallel", "parallel")),
    )(scale, x2)
    return out2.reshape(x.shape)


class DropPath:
    """Mirror of the PyTorch module (no learnable parameters)."""

    def __init__(self, drop_prob=None):
        self.drop_prob = drop_prob
        self.training = True

    def __call__(self, x, *, key=None, seed=0):
        return drop_path(x, self.drop_prob, key=key, seed=seed,
                         training=self.training)


if __name__ == "__main__":
    key = jax.random.PRNGKey(0)
    kx, kdrop = jax.random.split(key)
    B, S, D = 2, 8, 32
    x = jax.random.normal(kx, (B, S, D), dtype=jnp.float32)

    drop_prob = 0.25
    module = DropPath(drop_prob)

    out = jax.block_until_ready(module(x, key=kdrop))

    # Exact reference: same Bernoulli draw as the wrapper.
    keep_prob = 1.0 - drop_prob
    keep = jax.random.bernoulli(kdrop, p=keep_prob, shape=(B,))
    ref = x * jnp.where(keep, 1.0 / keep_prob, 0.0)[:, None, None]
    assert jnp.allclose(out, ref, atol=1e-6, rtol=1e-6), "mismatch vs reference"

    # Structural check: each sample is either all zeros or exactly x / keep_prob.
    for b in range(B):
        ob = out[b]
        zero = bool(jnp.all(ob == 0.0))
        scaled = bool(jnp.allclose(ob, x[b] / keep_prob, atol=1e-5, rtol=1e-5))
        assert zero or scaled, "sample is neither zeroed nor x/keep_prob"

    # eval mode / drop_prob=0 is identity (no kernel launch).
    module.training = False
    out_eval = jax.block_until_ready(module(x))
    assert bool(jnp.array_equal(out_eval, x))

    print("KERNEL_OK")
</pallas_src>

<mosaic_0001>
module attributes {stable_mosaic.version = 11 : i64} {
  func.func @_drop_path_kernel(%arg0: i32, %arg1: i32, %arg2: memref<2x1xf32, #tpu.memory_space<vmem>>, %arg3: memref<2x256xf32, #tpu.memory_space<vmem>>, %arg4: memref<2x256xf32, #tpu.memory_space<vmem>>) attributes {dimension_semantics = [#tpu.dimension_semantics<parallel>, #tpu.dimension_semantics<parallel>], iteration_bounds = array<i64: 1, 1>, scalar_prefetch = 0 : i64, scratch_operands = 0 : i64, tpu.core_type = #tpu.core_type<tc>, window_params = [{transform_indices = @transform_0, window_bounds = array<i64: 2, 1>}, {transform_indices = @transform_1, window_bounds = array<i64: 2, 256>}, {transform_indices = @transform_2, window_bounds = array<i64: 2, 256>}]} {
    %c0 = arith.constant 0 : index
    %c0_0 = arith.constant 0 : index
    %0 = vector.load %arg3[%c0, %c0_0] : memref<2x256xf32, #tpu.memory_space<vmem>>, vector<2x256xf32>
    %c0_1 = arith.constant 0 : index
    %c0_2 = arith.constant 0 : index
    %1 = vector.load %arg2[%c0_1, %c0_2] : memref<2x1xf32, #tpu.memory_space<vmem>>, vector<2x1xf32>
    %2 = vector.broadcast %1 : vector<2x1xf32> to vector<2x256xf32>
    %3 = arith.mulf %0, %2 : vector<2x256xf32>
    %c0_3 = arith.constant 0 : index
    %c0_4 = arith.constant 0 : index
    %4 = vector.load %arg4[%c0_3, %c0_4] : memref<2x256xf32, #tpu.memory_space<vmem>>, vector<2x256xf32>
    tpu.vector_store %arg4[%c0_3, %c0_4], %3 {strides = array<i32>} : memref<2x256xf32, #tpu.memory_space<vmem>>, vector<2x256xf32>,
    return
  }
  func.func @transform_0(%arg0: i32, %arg1: i32) -> (i32, i32) {
    %c0_i32 = arith.constant 0 : i32
    %c0_i32_0 = arith.constant 0 : i32
    return %arg0, %c0_i32 : i32, i32
  }
  func.func @transform_1(%arg0: i32, %arg1: i32) -> (i32, i32) {
    %c0_i32 = arith.constant 0 : i32
    return %arg0, %arg1 : i32, i32
  }
  func.func @transform_2(%arg0: i32, %arg1: i32) -> (i32, i32) {
    %c0_i32 = arith.constant 0 : i32
    return %arg0, %arg1 : i32, i32
  }
}

</mosaic_0001>

<llo_original>
// kernel: tpu_custom_call.1
$region0: #{tpu_custom_call.1}
  #allocation0 [shape = 'u32[]', space=smem, size = 0x4, offset = 0x4, fixed_abs, tag = 'smem constant byte address 0x4 - core index']
  #allocation1 [shape = 'u32[72,128]{1,0:T(1,128)}', space=vmem, size = 0x9000, scoped, tag = 'internal scratch']
  %s0 = inlined_call_operand.vmem [shape: f32[2,1], index: 0, kind: input, shape index: {}]
  %s1 = inlined_call_operand.hbm [shape: f32[2,256], index: 1, kind: input, shape index: {}]
  %s2 = inlined_call_operand.hbm [shape: f32[2,256], index: 2, kind: output, shape index: {}]
  %s3 = sld [smem:[#allocation0]]
  $region22: #{tpu_custom_call.1} parent=0
    _
  %s5 = ssub.s32 1, %s3
  %s6 = scalar_select 0, %s5, %s3
  $region1: #{tpu_custom_call.1} parent=0
    #allocation2 [shape = 'u8[2048]{0}', space=vmem, size = 0x800, scoped, tag = 'input window, operand 1, single buffered']
    #allocation3 [shape = 's32[1]{0}', space=sflag, size = 0x4, scoped, tag = 'scoped memory for tpu_custom_call.1']
    #allocation4 [shape = 's32[1]{0}', space=sflag, size = 0x4, scoped, tag = 'scoped memory for tpu_custom_call.1']
    #allocation5 [shape = 'u8[2048]{0}', space=vmem, size = 0x800, scoped, tag = 'output window, operand 0, single buffered']
    %7 = vsyncpa [#allocation3], 0
    %8 = vsyncpa [#allocation4], 0
    // Predicated region
    $region2: #{tpu_custom_call.1} parent=1 // pred_check
      _
    $region3: #{tpu_custom_call.1} parent=1 // pred_check_branch
      %10 = sbr.rel (0) target = $region5
    $region4: #{tpu_custom_call.1} parent=1 // pred_region
      _
    $region5: #{tpu_custom_call.1} parent=1 // pred_fallthru
      _
    // Predicated region
    $region6: #{tpu_custom_call.1} parent=1 // pred_check
      _
    $region7: #{tpu_custom_call.1} parent=1 // pred_check_branch
      %12 = sbr.rel (0) target = $region9
    $region8: #{tpu_custom_call.1} parent=1 // pred_region
      %14 = vsyncadd [#allocation3], 0
      %s16 = sshll.u32 %s1, 4
      %s17 = int_to_ptr.hbm [resolvable:$true] %s16
      %s18 = sshll.u32 [#allocation2], 4
      %s19 = int_to_ptr.vmem [resolvable:$true] %s18
      %21 = dma.hbm_to_vmem [thread:$0]  %s17, 64, %s19, [#allocation3]
    $region9: #{tpu_custom_call.1} parent=1 // pred_fallthru
      _
    // Predicated region
    $region10: #{tpu_custom_call.1} parent=1 // pred_check
      _
    $region11: #{tpu_custom_call.1} parent=1 // pred_check_branch
      %23 = sbr.rel (0) target = $region13
    $region12: #{tpu_custom_call.1} parent=1 // pred_region
      %25 = dma.done [#allocation3], 64
    $region13: #{tpu_custom_call.1} parent=1 // pred_fallthru
      _
    %v26 = vld [vmem:[#allocation2] sm:$0xf]
    %v27 = vld [vmem:[%s0] sm:$0x3]
    %29 = vset.pattern.permute.xlu0 0
    %30 = vperm.xlu0 %29, %v27
    %v31 = vpop.permute.xlu0 %30
    %v33 = vunpack.c.l.s4 269488144
    %v34 = vunpack.c.0.s8 %v33
    %v35 = vperm.slane %v31, %v34
    %v37 = vmul.f32 %v26, %v35
    %38 = vst [vmem:[#allocation5] sm:$0xf] %v37
    // Predicated region
    $region14: #{tpu_custom_call.1} parent=1 // pred_check
      _
    $region15: #{tpu_custom_call.1} parent=1 // pred_check_branch
      %40 = sbr.rel (0) target = $region17
    $region16: #{tpu_custom_call.1} parent=1 // pred_region
      %42 = vsyncadd [#allocation4], 0
      %s44 = sshll.u32 [#allocation5], 4
      %s45 = int_to_ptr.vmem [resolvable:$true] %s44
      %s46 = sshll.u32 %s2, 4
      %s47 = int_to_ptr.hbm [resolvable:$true] %s46
      %49 = dma.vmem_to_hbm [thread:$0]  %s45, 64, %s47, [#allocation4]
    $region17: #{tpu_custom_call.1} parent=1 // pred_fallthru
      _
    // Predicated region
    $region18: #{tpu_custom_call.1} parent=1 // pred_check
      _
    $region19: #{tpu_custom_call.1} parent=1 // pred_check_branch
      %51 = sbr.rel (0) target = $region21
    $region20: #{tpu_custom_call.1} parent=1 // pred_region
      %53 = dma.done [#allocation4], 64
    $region21: #{tpu_custom_call.1} parent=1 // pred_fallthru
      _
    %54 = vsyncpa [#allocation3], 1
    %55 = vsyncpa [#allocation4], 1

</llo_original>
